<compile_context>
chip_gen: v5e
topology: v5e:2x2
jax: 0.10.0
libtpu: 0.0.40
codegen_flags: <defaults>
</compile_context>

<pallas_src>
import jax
import jax.numpy as jnp
import numpy as np
from jax.experimental import pallas as pl
from jax.experimental.pallas import tpu as pltpu

N_BEST = 5      # the module hard-codes 5 hypotheses in forward()
HIDDEN = 32     # synthetic text-embedding width
D_FEAT = 128    # CLIP feature dim (scaled down from 512)


def _rerank_kernel(nbest_ref, scores_ref, emb_ref, w_ref, img_ref, out_ref):
    n_best = nbest_ref[0, 0]                       # SMEM scalar (runtime knob)
    nrows = scores_ref.shape[0]
    row = jax.lax.broadcasted_iota(jnp.int32, (nrows, 1), 0)
    valid = row < n_best

    # --- CLIP branch -------------------------------------------------------
    # TODO(synk): real CLIP text transformer; modeled as one linear projection.
    text_feat = jnp.dot(emb_ref[...], w_ref[...],
                        preferred_element_type=jnp.float32)          # (N, D)
    img = img_ref[...]                                               # (1, D)

    # text.image dot on the MXU ((N,D) x (1,D) contracting on dim 1 -> (N,1)).
    dots = jax.lax.dot_general(
        text_feat, img,
        dimension_numbers=(((1,), (1,)), ((), ())),
        preferred_element_type=jnp.float32)                          # (N, 1)

    t_sq = jnp.sum(text_feat * text_feat, axis=1, keepdims=True)     # (N, 1)
    i_sq = jnp.sum(img * img, axis=1, keepdims=True)                 # (1, 1)
    # cosine similarity via rsqrt*mul (EUP) instead of sqrt + broadcast divide.
    clip_sims = (dots
                 * jax.lax.rsqrt(jnp.maximum(t_sq, jnp.float32(1e-24)))
                 * jax.lax.rsqrt(jnp.maximum(i_sq, jnp.float32(1e-16))))

    # --- acoustic / language branches --------------------------------------
    raw = scores_ref[...]                                            # (N, 2)
    # One fused EUP exp over the (N,2) block: col0 -> exp(acoustic),
    # col1 -> exp(-loss)  (pval = exp(-loss) from the GPT-2 LM).
    # TODO(synk): exp(acoustic) can overflow for raw scores > ~88 in f32; kept
    # as-is to match the torch module's np.exp + log_softmax semantics.
    # TODO(synk): GPT-2 LM loss computed externally; we receive the loss value.
    col2 = jax.lax.broadcasted_iota(jnp.int32, (nrows, 2), 1)
    ex = jnp.exp(jnp.where(col2 == 0, raw, -raw))                    # (N, 2)
    acoustic = ex[:, 0:1]
    language = ex[:, 1:2]

    # --- single merged masked log_softmax over the n-best axis --------------
    # Assemble the (N, 3) [acoustic, language, clip] block with broadcast
    # selects (cheap VPU ops; avoids a lane-dim concatenate).
    col = jax.lax.broadcasted_iota(jnp.int32, (nrows, 3), 1)
    x = jnp.where(col == 0, acoustic,
                  jnp.where(col == 1, language, clip_sims))          # (N, 3)

    neg = jnp.float32(-1e30)
    xm = jnp.where(valid, x, neg)
    m = jnp.max(xm, axis=0, keepdims=True)
    e = jnp.where(valid, jnp.exp(xm - m), 0.0)
    s = jnp.sum(e, axis=0, keepdims=True)
    out_ref[...] = xm - m - jnp.log(s)                               # one store


def rerank_pipeline(acoustic_raw, gpt2_losses, text_emb, clip_w, image_feat,
                    labels, n_best=N_BEST):
    """Returns (h_scores of shape (3*n_best,), labels) like the torch forward."""
    # Fuse the two tiny score vectors into one operand; no sublane padding.
    scores = jnp.stack([acoustic_raw, gpt2_losses], axis=1).astype(jnp.float32)
    nb = jnp.array([[n_best]], dtype=jnp.int32)

    out = pl.pallas_call(
        _rerank_kernel,
        out_shape=jax.ShapeDtypeStruct((scores.shape[0], 3), jnp.float32),
        in_specs=[
            pl.BlockSpec(memory_space=pltpu.MemorySpace.SMEM),   # n_best scalar
            pl.BlockSpec(memory_space=pltpu.MemorySpace.VMEM),   # [acoustic, loss]
            pl.BlockSpec(memory_space=pltpu.MemorySpace.VMEM),   # text embeddings
            pl.BlockSpec(memory_space=pltpu.MemorySpace.VMEM),   # CLIP text proj W
            pl.BlockSpec(memory_space=pltpu.MemorySpace.VMEM),   # CLIP image feat
        ],
        out_specs=pl.BlockSpec(memory_space=pltpu.MemorySpace.VMEM),
    )(nb, scores, text_emb, clip_w, image_feat)

    # interleave exactly like torch.cat along dim=1: [a0,l0,c0,a1,l1,c1,...]
    h_scores = out.reshape(-1)
    # TODO(synk): reshuffle=True (random.shuffle of hypotheses) is host-side
    # Python randomness, not reproduced in the kernel.
    return h_scores, jnp.asarray(labels)


def _reference(acoustic_raw, gpt2_losses, text_emb, clip_w, image_feat, n_best):
    def log_softmax(x):
        m = np.max(x)
        e = np.exp(x - m)
        return (x - m) - np.log(np.sum(e))

    tf = text_emb @ clip_w                                   # (n_best, D)
    tu = tf / np.linalg.norm(tf, axis=1, keepdims=True)
    img = image_feat[0]
    sims = tu @ img / max(np.linalg.norm(img), 1e-8)

    a = log_softmax(np.exp(acoustic_raw))
    l = log_softmax(np.exp(-gpt2_losses))
    c = log_softmax(sims)
    return np.stack([a, l, c], axis=1).reshape(-1)


if __name__ == "__main__":
    key = jax.random.PRNGKey(0)
    k1, k2, k3, k4, k5 = jax.random.split(key, 5)

    # deterministic synthetic inputs / parameters
    acoustic_raw = -jnp.abs(jax.random.normal(k1, (N_BEST,), jnp.float32))      # raw log-acoustic scores
    gpt2_losses = 2.0 + jnp.abs(jax.random.normal(k2, (N_BEST,), jnp.float32))  # per-sentence GPT-2 losses
    text_emb = jax.random.normal(k3, (N_BEST, HIDDEN), jnp.float32)             # tokenized-text embeddings
    clip_w = jax.random.normal(k4, (HIDDEN, D_FEAT), jnp.float32) / np.sqrt(HIDDEN)  # synthetic CLIP text proj
    image_feat = jax.random.normal(k5, (1, D_FEAT), jnp.float32)                # CLIP image features
    labels = jnp.arange(N_BEST, dtype=jnp.int32)

    h_scores, out_labels = rerank_pipeline(
        acoustic_raw, gpt2_losses, text_emb, clip_w, image_feat, labels)
    jax.block_until_ready(h_scores)
    jax.block_until_ready(out_labels)

    ref = _reference(np.asarray(acoustic_raw), np.asarray(gpt2_losses),
                     np.asarray(text_emb), np.asarray(clip_w),
                     np.asarray(image_feat), N_BEST)
    np.testing.assert_allclose(np.asarray(h_scores), ref, rtol=1e-5, atol=1e-5)
    assert h_scores.shape == (3 * N_BEST,)
    assert np.array_equal(np.asarray(out_labels), np.arange(N_BEST))
    print("KERNEL_OK")
</pallas_src>

<mosaic_0001>
module attributes {stable_mosaic.version = 11 : i64} {
  func.func @_rerank_kernel(%arg0: memref<1x1xi32, #tpu.memory_space<smem>>, %arg1: memref<5x2xf32, #tpu.memory_space<vmem>>, %arg2: memref<5x32xf32, #tpu.memory_space<vmem>>, %arg3: memref<32x128xf32, #tpu.memory_space<vmem>>, %arg4: memref<1x128xf32, #tpu.memory_space<vmem>>, %arg5: memref<5x3xf32, #tpu.memory_space<vmem>>) attributes {dimension_semantics = [], scalar_prefetch = 0 : i64, scratch_operands = 0 : i64, tpu.core_type = #tpu.core_type<tc>} {
    %c0 = arith.constant 0 : index
    %c0_0 = arith.constant 0 : index
    %0 = memref.load %arg0[%c0, %c0_0] : memref<1x1xi32, #tpu.memory_space<smem>>
    %1 = tpu.iota {dimensions = array<i32: 0>} : vector<5x1xi32>
    %2 = vector.broadcast %0 : i32 to vector<5x1xi32>
    %3 = arith.cmpi slt, %1, %2 : vector<5x1xi32>
    %c0_1 = arith.constant 0 : index
    %c0_2 = arith.constant 0 : index
    %4 = vector.load %arg2[%c0_1, %c0_2] : memref<5x32xf32, #tpu.memory_space<vmem>>, vector<5x32xf32>
    %c0_3 = arith.constant 0 : index
    %c0_4 = arith.constant 0 : index
    %5 = vector.load %arg3[%c0_3, %c0_4] : memref<32x128xf32, #tpu.memory_space<vmem>>, vector<32x128xf32>
    %cst = arith.constant dense<0.000000e+00> : vector<5x128xf32>
    %6 = tpu.matmul %4, %5, %cst {dimension_numbers = #tpu.dot_dimension_numbers<[1], [0], [0], [1], [0, 0, 1, 1], [], []>} : vector<5x32xf32>, vector<32x128xf32>, vector<5x128xf32> -> vector<5x128xf32>
    %c0_5 = arith.constant 0 : index
    %c0_6 = arith.constant 0 : index
    %7 = vector.load %arg4[%c0_5, %c0_6] : memref<1x128xf32, #tpu.memory_space<vmem>>, vector<1x128xf32>
    %cst_7 = arith.constant dense<0.000000e+00> : vector<5x1xf32>
    %8 = tpu.matmul %6, %7, %cst_7 {dimension_numbers = #tpu.dot_dimension_numbers<[1], [1], [0], [0], [0, 0, 1, 0], [], []>} : vector<5x128xf32>, vector<1x128xf32>, vector<5x1xf32> -> vector<5x1xf32>
    %9 = arith.mulf %6, %6 : vector<5x128xf32>
    %cst_8 = arith.constant dense<0.000000e+00> : vector<5xf32>
    %10 = vector.multi_reduction <add>, %9, %cst_8 [1] : vector<5x128xf32> to vector<5xf32>
    %11 = vector.shape_cast %10 : vector<5xf32> to vector<5x1xf32>
    %12 = arith.mulf %7, %7 : vector<1x128xf32>
    %cst_9 = arith.constant dense<0.000000e+00> : vector<1xf32>
    %13 = vector.multi_reduction <add>, %12, %cst_9 [1] : vector<1x128xf32> to vector<1xf32>
    %14 = vector.shape_cast %13 : vector<1xf32> to vector<1x1xf32>
    %cst_10 = arith.constant 1.000000e-24 : f32
    %15 = vector.broadcast %cst_10 : f32 to vector<5x1xf32>
    %16 = arith.maximumf %11, %15 : vector<5x1xf32>
    %17 = math.rsqrt %16 : vector<5x1xf32>
    %18 = arith.mulf %8, %17 : vector<5x1xf32>
    %cst_11 = arith.constant 1.000000e-16 : f32
    %19 = vector.broadcast %cst_11 : f32 to vector<1x1xf32>
    %20 = arith.maximumf %14, %19 : vector<1x1xf32>
    %21 = math.rsqrt %20 : vector<1x1xf32>
    %22 = vector.broadcast %21 : vector<1x1xf32> to vector<5x1xf32>
    %23 = arith.mulf %18, %22 : vector<5x1xf32>
    %c0_12 = arith.constant 0 : index
    %c0_13 = arith.constant 0 : index
    %24 = vector.load %arg1[%c0_12, %c0_13] : memref<5x2xf32, #tpu.memory_space<vmem>>, vector<5x2xf32>
    %25 = tpu.iota {dimensions = array<i32: 1>} : vector<5x2xi32>
    %c0_i32 = arith.constant 0 : i32
    %26 = vector.broadcast %c0_i32 : i32 to vector<5x2xi32>
    %27 = arith.cmpi eq, %25, %26 : vector<5x2xi32>
    %cst_14 = arith.constant 0.000000e+00 : f32
    %28 = vector.broadcast %cst_14 : f32 to vector<5x2xf32>
    %29 = arith.subf %28, %24 : vector<5x2xf32>
    %30 = arith.select %27, %24, %29 : vector<5x2xi1>, vector<5x2xf32>
    %31 = math.exp %30 : vector<5x2xf32>
    %32 = vector.extract_strided_slice %31 {offsets = [0, 0], sizes = [5, 1], strides = [1, 1]} : vector<5x2xf32> to vector<5x1xf32>
    %33 = vector.extract_strided_slice %31 {offsets = [0, 1], sizes = [5, 1], strides = [1, 1]} : vector<5x2xf32> to vector<5x1xf32>
    %34 = tpu.iota {dimensions = array<i32: 1>} : vector<5x3xi32>
    %c0_i32_15 = arith.constant 0 : i32
    %35 = vector.broadcast %c0_i32_15 : i32 to vector<5x3xi32>
    %36 = arith.cmpi eq, %34, %35 : vector<5x3xi32>
    %c1_i32 = arith.constant 1 : i32
    %37 = vector.broadcast %c1_i32 : i32 to vector<5x3xi32>
    %38 = arith.cmpi eq, %34, %37 : vector<5x3xi32>
    %39 = vector.shape_cast %33 : vector<5x1xf32> to vector<5x1xf32>
    %40 = vector.broadcast %39 : vector<5x1xf32> to vector<5x3xf32>
    %41 = vector.shape_cast %23 : vector<5x1xf32> to vector<5x1xf32>
    %42 = vector.broadcast %41 : vector<5x1xf32> to vector<5x3xf32>
    %43 = arith.select %38, %40, %42 : vector<5x3xi1>, vector<5x3xf32>
    %44 = vector.shape_cast %32 : vector<5x1xf32> to vector<5x1xf32>
    %45 = vector.broadcast %44 : vector<5x1xf32> to vector<5x3xf32>
    %46 = arith.select %36, %45, %43 : vector<5x3xi1>, vector<5x3xf32>
    %cst_16 = arith.constant -1.000000e+30 : f32
    %47 = vector.shape_cast %3 : vector<5x1xi1> to vector<5x1xi1>
    %48 = vector.broadcast %47 : vector<5x1xi1> to vector<5x3xi1>
    %49 = vector.broadcast %cst_16 : f32 to vector<5x3xf32>
    %50 = arith.select %48, %46, %49 : vector<5x3xi1>, vector<5x3xf32>
    %cst_17 = arith.constant dense<0xFF800000> : vector<3xf32>
    %51 = vector.multi_reduction <maximumf>, %50, %cst_17 [0] : vector<5x3xf32> to vector<3xf32>
    %52 = vector.shape_cast %51 : vector<3xf32> to vector<1x3xf32>
    %53 = vector.broadcast %52 : vector<1x3xf32> to vector<5x3xf32>
    %54 = arith.subf %50, %53 : vector<5x3xf32>
    %55 = math.exp %54 : vector<5x3xf32>
    %cst_18 = arith.constant 0.000000e+00 : f32
    %56 = vector.shape_cast %3 : vector<5x1xi1> to vector<5x1xi1>
    %57 = vector.broadcast %56 : vector<5x1xi1> to vector<5x3xi1>
    %58 = vector.broadcast %cst_18 : f32 to vector<5x3xf32>
    %59 = arith.select %57, %55, %58 : vector<5x3xi1>, vector<5x3xf32>
    %cst_19 = arith.constant dense<0.000000e+00> : vector<3xf32>
    %60 = vector.multi_reduction <add>, %59, %cst_19 [0] : vector<5x3xf32> to vector<3xf32>
    %61 = vector.shape_cast %60 : vector<3xf32> to vector<1x3xf32>
    %62 = vector.broadcast %52 : vector<1x3xf32> to vector<5x3xf32>
    %63 = arith.subf %50, %62 : vector<5x3xf32>
    %64 = math.log %61 : vector<1x3xf32>
    %65 = vector.broadcast %64 : vector<1x3xf32> to vector<5x3xf32>
    %66 = arith.subf %63, %65 : vector<5x3xf32>
    %c0_20 = arith.constant 0 : index
    %c0_21 = arith.constant 0 : index
    %67 = vector.load %arg5[%c0_20, %c0_21] : memref<5x3xf32, #tpu.memory_space<vmem>>, vector<5x3xf32>
    tpu.vector_store %arg5[%c0_20, %c0_21], %66 {strides = array<i32>} : memref<5x3xf32, #tpu.memory_space<vmem>>, vector<5x3xf32>,
    return
  }
}

</mosaic_0001>

<llo_original>
// kernel: tpu_custom_call.1
$region0: #{tpu_custom_call.1}
  #allocation0 [shape = 'u32[]', space=smem, size = 0x4, offset = 0x4, fixed_abs, tag = 'smem constant byte address 0x4 - core index']
  #allocation1 [shape = 'u32[72,128]{1,0:T(1,128)}', space=vmem, size = 0x9000, scoped, tag = 'internal scratch']
  #allocation2 [shape = 's32[1,1]{1,0:T(1,128)S(6)}', space=smem, size = 0x200, scoped, tag = 'scoped memory for tpu_custom_call.1']
  %s0 = inlined_call_operand.<no memory space> [shape: s32[1,1], index: 0, kind: input, shape index: {}]
  %s1 = inlined_call_operand.vmem [shape: f32[5,2], index: 1, kind: input, shape index: {}]
  %s2 = inlined_call_operand.vmem [shape: f32[5,32], index: 2, kind: input, shape index: {}]
  %s3 = inlined_call_operand.hbm [shape: f32[32,128], index: 3, kind: input, shape index: {}]
  %s4 = inlined_call_operand.vmem [shape: f32[1,128], index: 4, kind: input, shape index: {}]
  %s5 = inlined_call_operand.vmem [shape: f32[5,3], index: 5, kind: output, shape index: {}]
  %s6 = sld [smem:[#allocation0]]
  $region34: #{tpu_custom_call.1} parent=0
    _
  %s8 = ssub.s32 1, %s6
  %s9 = scalar_select 0, %s8, %s6
  %10 = sst [smem:[#allocation2]] %s0
  $region1: #{tpu_custom_call.1} parent=0
    #allocation3 [shape = 'u8[16384]{0}', space=vmem, size = 0x4000, scoped, tag = 'input window, operand 3, single buffered']
    #allocation4 [shape = 's32[1]{0}', space=sflag, size = 0x4, scoped, tag = 'scoped memory for tpu_custom_call.1']
    %11 = vsyncpa [#allocation4], 0
    // Predicated region
    $region2: #{tpu_custom_call.1} parent=1 // pred_check
      _
    $region3: #{tpu_custom_call.1} parent=1 // pred_check_branch
      %13 = sbr.rel (0) target = $region5
    $region4: #{tpu_custom_call.1} parent=1 // pred_region
      _
    $region5: #{tpu_custom_call.1} parent=1 // pred_fallthru
      _
    // Predicated region
    $region6: #{tpu_custom_call.1} parent=1 // pred_check
      _
    $region7: #{tpu_custom_call.1} parent=1 // pred_check_branch
      %15 = sbr.rel (0) target = $region9
    $region8: #{tpu_custom_call.1} parent=1 // pred_region
      _
    $region9: #{tpu_custom_call.1} parent=1 // pred_fallthru
      _
    // Predicated region
    $region10: #{tpu_custom_call.1} parent=1 // pred_check
      _
    $region11: #{tpu_custom_call.1} parent=1 // pred_check_branch
      %17 = sbr.rel (0) target = $region13
    $region12: #{tpu_custom_call.1} parent=1 // pred_region
      _
    $region13: #{tpu_custom_call.1} parent=1 // pred_fallthru
      _
    // Predicated region
    $region14: #{tpu_custom_call.1} parent=1 // pred_check
      _
    $region15: #{tpu_custom_call.1} parent=1 // pred_check_branch
      %19 = sbr.rel (0) target = $region17
    $region16: #{tpu_custom_call.1} parent=1 // pred_region
      %21 = vsyncadd [#allocation4], 0
      %s22 = sshll.u32 %s3, 4
      %s23 = int_to_ptr.hbm [resolvable:$true] %s22
      %s24 = sshll.u32 [#allocation3], 4
      %s25 = int_to_ptr.vmem [resolvable:$true] %s24
      %30 = dma.hbm_to_vmem [thread:$0]  %s23, 512, %s25, [#allocation4], 128, 128, 8
    $region17: #{tpu_custom_call.1} parent=1 // pred_fallthru
      _
    // Predicated region
    $region18: #{tpu_custom_call.1} parent=1 // pred_check
      _
    $region19: #{tpu_custom_call.1} parent=1 // pred_check_branch
      %32 = sbr.rel (0) target = $region21
    $region20: #{tpu_custom_call.1} parent=1 // pred_region
      _
    $region21: #{tpu_custom_call.1} parent=1 // pred_fallthru
      _
    // Predicated region
    $region22: #{tpu_custom_call.1} parent=1 // pred_check
      _
    $region23: #{tpu_custom_call.1} parent=1 // pred_check_branch
      %34 = sbr.rel (0) target = $region25
    $region24: #{tpu_custom_call.1} parent=1 // pred_region
      %36 = dma.done [#allocation4], 512
    $region25: #{tpu_custom_call.1} parent=1 // pred_fallthru
      _
    %s37 = sld [smem:[#allocation2]]
    %v38 = vlaneseq
    %v39 = vshrl.u32 %v38, 7
    %v40 = vstv %s37
    %vm41 = vcmp.lt.s32.totalorder %v39, %v40
    %v42 = vld [vmem:[%s2] sm:$0x1f]
    %v43 = vld [vmem:[#allocation3] sm:$0xff]
    %v44 = vld [vmem:[#allocation3 + $0x8] sm:$0xff]
    %v45 = vld [vmem:[#allocation3 + $0x10] sm:$0xff]
    %v46 = vld [vmem:[#allocation3 + $0x18] sm:$0xff]
    %vm47 = vcmask 261120
    %v49 = vsel %vm47, %v42, 0
    %51 = vmatpush.msra.mxu0 0.0
    %52 = vmatpush.msra.mxu0 0.0
    %53 = vmatpush.msra.mxu0 0.0
    %54 = vmatpush.msra.mxu0 0.0
    %55 = vmatpush.msra.mxu0 0.0
    %56 = vmatpush.msra.mxu0 0.0
    %57 = vmatpush.msra.mxu0 0.0
    %58 = vmatpush.msra.mxu0 0.0
    %59 = vmatpush.msra.mxu0 0.0
    %60 = vmatpush.msra.mxu0 0.0
    %61 = vmatpush.msra.mxu0 0.0
    %62 = vmatpush.msra.mxu0 0.0
    %63 = vmatpush.msra.mxu0 %v46
    %64 = vmatpush.msra.mxu0 %v45
    %65 = vmatpush.msra.mxu0 %v44
    %66 = vmatpush.msra.mxu0 %v43
    %67 = vmatmul.f32.gmra.mxu0 %v49
    %v68 = vpop.f32.mrf.mxu0
    %v69 = vadd.f32 0.0, %v68
    %70 = vdwg.mxu0
    %v71 = vld [vmem:[%s4] sm:$0x1]
    %v73 = vperm.slane %v71, 0
    %v75 = vmul.f32 %v69, %v73
    %vm76 = vcmask 1044480
    %v77 = vsel %vm76, %v75, 0.0
    %78 = vadd.xlane.f32.xlu0 %v77
    %v79 = vpop.xlane.xlu0 %78
    %v80 = vmul.f32 %v69, %v69
    %v81 = vsel %vm76, %v80, 0.0
    %82 = vadd.xlane.f32.xlu0 %v81
    %v83 = vpop.xlane.xlu0 %82
    %v84 = vmul.f32 %v71, %v71
    %vm85 = vcmask 1040384
    %v86 = vsel %vm85, %v84, 0.0
    %87 = vadd.xlane.f32.xlu0 %v86
    %v88 = vpop.xlane.xlu0 %87
    %v89 = vmax.f32 %v83, 1e-24
    %v90 = vrsqrt.pop %v89
    %v91 = vmul.f32 %v90, %v89
    %v92 = vmul.f32 %v91, %v90
    %v93 = vmul.f32 0.5, %v92
    %v94 = vsub.f32 1.5, %v93
    %v95 = vmul.f32 %v90, %v94
    %vm96 = vweird.f32 %v89
    %vm97 = vweird.f32 %v90
    %vm98 = vmor %vm96, %vm97
    %v99 = vsel %vm98, %v90, %v95
    %v100 = vmul.f32 %v79, %v99
    %v101 = vmax.f32 %v88, 1e-16
    %v102 = vrsqrt.pop %v101
    %v103 = vmul.f32 %v102, %v101
    %v104 = vmul.f32 %v103, %v102
    %v105 = vmul.f32 0.5, %v104
    %v106 = vsub.f32 1.5, %v105
    %v107 = vmul.f32 %v102, %v106
    %vm108 = vweird.f32 %v101
    %vm109 = vweird.f32 %v102
    %vm110 = vmor %vm108, %vm109
    %v111 = vsel %vm110, %v102, %v107
    %v112 = vperm.slane %v111, 0
    %v113 = vmul.f32 %v100, %v112
    %v114 = vld [vmem:[%s1] sm:$0x1f]
    %v115 = vlaneseq
    %v116 = vand.u32 %v115, 127
    %vm117 = vcmp.eq.s32.totalorder %v116, 0
    %v118 = vsub.f32 0.0, %v114
    %v119 = vsel %vm117, %v114, %v118
    %v120 = vmul.f32 %v119, 1.442695
    %v121 = vpow.pop %v120
    %vm122 = vcmp.eq.s32.totalorder %v116, 1
    %124 = vset.pattern.permute.xlu0 1
    %125 = vperm.xlu0 %124, %v121
    %v126 = vpop.permute.xlu0 %125
    %v128 = vsel %vm122, %v126, %v113
    %129 = vset.pattern.permute.xlu0 0
    %130 = vperm.xlu0 %129, %v121
    %v131 = vpop.permute.xlu0 %130
    %v133 = vsel %vm117, %v131, %v128
    %v134 = vsel %vm41, 1, 0
    %vm135 = vcmp.eq.s32.totalorder %v134, 1
    %v136 = vsel %vm135, %v133, -1e+30
    %vm137 = vcmask 20480
    %v138 = vsel %vm137, %v136, -inf
    %v139 = vrot.slane %v138, 4
    %v140 = vmax.f32 %v138, %v139
    %v141 = vrot.slane %v140, 2
    %v142 = vmax.f32 %v140, %v141
    %v143 = vrot.slane %v142, 1
    %v144 = vmax.f32 %v142, %v143
    %v145 = vsub.f32 %v136, %v144
    %v146 = vmul.f32 %v145, 1.442695
    %v147 = vpow.pop %v146
    %v148 = vsel %vm135, %v147, 0.0
    %v149 = vsel %vm137, %v148, 0.0
    %v150 = vrot.slane %v149, 4
    %v151 = vadd.f32 %v149, %v150
    %v152 = vrot.slane %v151, 2
    %v153 = vadd.f32 %v151, %v152
    %v154 = vrot.slane %v153, 1
    %v155 = vadd.f32 %v153, %v154
    %v156 = vlog2.pop %v155
    %v157 = vmul.f32 %v156, 0.6931472
    %v158 = vsub.f32 %v145, %v157
    %159 = vst.msk [vmem:[%s5] sm:$0x1f] %vm137, %v158
    // Predicated region
    $region26: #{tpu_custom_call.1} parent=1 // pred_check
      _
    $region27: #{tpu_custom_call.1} parent=1 // pred_check_branch
      %161 = sbr.rel (0) target = $region29
    $region28: #{tpu_custom_call.1} parent=1 // pred_region
      _
    $region29: #{tpu_custom_call.1} parent=1 // pred_fallthru
      _
    // Predicated region
    $region30: #{tpu_custom_call.1} parent=1 // pred_check
      _
    $region31: #{tpu_custom_call.1} parent=1 // pred_check_branch
      %163 = sbr.rel (0) target = $region33
    $region32: #{tpu_custom_call.1} parent=1 // pred_region
      _
    $region33: #{tpu_custom_call.1} parent=1 // pred_fallthru
      _
    %164 = vsyncpa [#allocation4], 1

</llo_original>
